<compile_context>
chip_gen: v6e
topology: v6e:2x2x1
jax: 0.10.0
libtpu: 0.0.40
codegen_flags: <defaults>
</compile_context>

<pallas_src>
import math

import jax
import jax.numpy as jnp
from jax.experimental import pallas as pl
from jax.experimental.pallas import tpu as pltpu


def _identity_kernel(x_ref, o_ref):
    # Pure pass-through on one tile.
    o_ref[...] = x_ref[...]


# ~2 MiB per block: in+out x double-buffer = ~8 MiB, safe under v5e's 16 MiB
# scoped-VMEM default and v7x's 32 MiB scoped / 64 MiB physical VMEM.
_TARGET_BLOCK_BYTES = 2 * 1024 * 1024


def _sublane_multiple(dtype):
    """Min second-to-last-dim multiple: 8 for 4B, 16 for 2B, 32 for 1B dtypes."""
    itemsize = jnp.dtype(dtype).itemsize
    return max(8, 32 // max(itemsize, 1))


def _lane_dense_layout(total_elems, sublane):
    """Pick (rows, cols) with cols a multiple of 128; prefer sublane-aligned rows."""
    for cols in (1024, 512, 256, 128):
        if total_elems % cols == 0 and (total_elems // cols) % sublane == 0:
            return total_elems // cols, cols
    for cols in (1024, 512, 256, 128):
        if total_elems % cols == 0:
            return total_elems // cols, cols
    return None


def _byte_targeted_rows(rows, cols, itemsize, sublane):
    """Byte-targeted tile rows, rounded down to the dtype sublane multiple."""
    target = max(1, _TARGET_BLOCK_BYTES // max(cols * itemsize, 1))
    tile = (target // sublane) * sublane
    if tile < sublane:
        tile = sublane
    if tile >= rows:
        return rows  # full extent is always a valid block dim
    return tile


def _materialized_copy(x):
    """Lane-dense, double-buffered identity copy (only when a copy is truly needed)."""
    total = math.prod(x.shape)
    itemsize = jnp.dtype(x.dtype).itemsize
    sublane = _sublane_multiple(x.dtype)
    cost = pl.CostEstimate(flops=0, transcendentals=0,
                           bytes_accessed=2 * total * itemsize)

    layout = _lane_dense_layout(total, sublane)
    if layout is not None:
        rows, cols = layout
        tile_rows = _byte_targeted_rows(rows, cols, itemsize, sublane)
        x2 = x.reshape(rows, cols)  # lane-dense 2-D slab
        out2 = pl.pallas_call(
            _identity_kernel,
            out_shape=jax.ShapeDtypeStruct((rows, cols), x.dtype),
            grid=(pl.cdiv(rows, tile_rows),),
            in_specs=[pl.BlockSpec((tile_rows, cols), lambda i: (i, 0))],
            out_specs=pl.BlockSpec((tile_rows, cols), lambda i: (i, 0)),
            input_output_aliases={0: 0},
            cost_estimate=cost,
            compiler_params=pltpu.CompilerParams(
                dimension_semantics=("parallel",),
            ),
        )(x2)
        return out2.reshape(x.shape)

    # Fallback (total not divisible by 128): tile along the leading dim with
    # full-extent trailing dims (full-extent dims always satisfy the BlockSpec
    # divisibility rule), keeping per-block bytes near the same target.
    if x.ndim >= 2:
        lead = x.shape[0]
        trailing = tuple(x.shape[1:])
        if x.ndim == 2:
            # Leading dim is the second-to-last dim: keep it sublane-aligned.
            tile_lead = _byte_targeted_rows(lead, trailing[0], itemsize, sublane)
        else:
            trailing_bytes = max(math.prod(trailing) * itemsize, 1)
            tile_lead = max(1, min(lead, _TARGET_BLOCK_BYTES // trailing_bytes))
        block = (tile_lead,) + trailing
        ndim = x.ndim
        index_map = lambda i: (i,) + (0,) * (ndim - 1)
        return pl.pallas_call(
            _identity_kernel,
            out_shape=jax.ShapeDtypeStruct(x.shape, x.dtype),
            grid=(pl.cdiv(lead, tile_lead),),
            in_specs=[pl.BlockSpec(block, index_map)],
            out_specs=pl.BlockSpec(block, index_map),
            input_output_aliases={0: 0},
            cost_estimate=cost,
            compiler_params=pltpu.CompilerParams(
                dimension_semantics=("parallel",),
            ),
        )(x)

    # 0-D / 1-D awkward sizes: tiny, single whole-array block.
    return pl.pallas_call(
        _identity_kernel,
        out_shape=jax.ShapeDtypeStruct(x.shape, x.dtype),
        input_output_aliases={0: 0},
        cost_estimate=cost,
    )(x)


def print_module_forward(x, materialize=False):
    """JAX/Pallas equivalent of Print.forward: prints shape, returns x.

    Default path is a zero-copy identity (the dominant optimization: no HBM
    traffic at all).  Set materialize=True only if a distinct output buffer
    is required; that path runs the lane-dense Pallas copy kernel.
    """
    # Host-side side effect, matching `print(x.shape)` in PyTorch.
    print(tuple(x.shape))

    if not materialize:
        return x
    return _materialized_copy(x)


if __name__ == "__main__":
    key = jax.random.PRNGKey(0)
    # Small NCHW input consistent with a VAE-style conv feature map.
    x = jax.random.normal(key, (2, 4, 16, 16), dtype=jnp.float32)

    # Default path: zero-copy identity (matches Print.forward semantics).
    y = print_module_forward(x)
    y = jax.block_until_ready(y)
    assert y.shape == x.shape and y.dtype == x.dtype
    assert bool(jnp.all(y == x))

    # Materialized-copy path: exercises the Pallas kernel on TPU.
    y2 = print_module_forward(x, materialize=True)
    y2 = jax.block_until_ready(y2)
    assert y2.shape == x.shape and y2.dtype == x.dtype
    assert bool(jnp.all(y2 == x))

    print("KERNEL_OK")
</pallas_src>

<mosaic_0001>
module attributes {stable_mosaic.version = 11 : i64} {
  func.func @_identity_kernel(%arg0: i32, %arg1: memref<8x256xf32, #tpu.memory_space<vmem>>, %arg2: memref<8x256xf32, #tpu.memory_space<vmem>>) attributes {dimension_semantics = [#tpu.dimension_semantics<parallel>], iteration_bounds = array<i64: 1>, scalar_prefetch = 0 : i64, scratch_operands = 0 : i64, tpu.core_type = #tpu.core_type<tc>, window_params = [{transform_indices = @transform_0, window_bounds = array<i64: 8, 256>}, {transform_indices = @transform_1, window_bounds = array<i64: 8, 256>}]} {
    %c0 = arith.constant 0 : index
    %c0_0 = arith.constant 0 : index
    %0 = vector.load %arg1[%c0, %c0_0] : memref<8x256xf32, #tpu.memory_space<vmem>>, vector<8x256xf32>
    %c0_1 = arith.constant 0 : index
    %c0_2 = arith.constant 0 : index
    %1 = vector.load %arg2[%c0_1, %c0_2] : memref<8x256xf32, #tpu.memory_space<vmem>>, vector<8x256xf32>
    tpu.vector_store %arg2[%c0_1, %c0_2], %0 {strides = array<i32>} : memref<8x256xf32, #tpu.memory_space<vmem>>, vector<8x256xf32>,
    return
  }
  func.func @transform_0(%arg0: i32) -> (i32, i32) {
    %c0_i32 = arith.constant 0 : i32
    %c0_i32_0 = arith.constant 0 : i32
    return %arg0, %c0_i32 : i32, i32
  }
  func.func @transform_1(%arg0: i32) -> (i32, i32) {
    %c0_i32 = arith.constant 0 : i32
    %c0_i32_0 = arith.constant 0 : i32
    return %arg0, %c0_i32 : i32, i32
  }
}

</mosaic_0001>

<llo_original>
// kernel: tpu_custom_call.1
$region0: #{tpu_custom_call.1}
  #allocation0 [shape = 'u32[]', space=smem, size = 0x4, offset = 0x4, fixed_abs, tag = 'smem constant byte address 0x4 - core index']
  #allocation1 [shape = 'u32[144,128]{1,0:T(1,128)}', space=vmem, size = 0x12000, scoped, tag = 'internal scratch']
  %s0 = inlined_call_operand.hbm [shape: f32[8,256], index: 0, kind: input, shape index: {}, may-alias: {0,1}]
  %s1 = inlined_call_operand.hbm [shape: f32[8,256], index: 1, kind: output, shape index: {}, may-alias: {0,1}]
  %s2 = sld [smem:[#allocation0]]
  $region18: #{tpu_custom_call.1} parent=0
    _
  %s4 = ssub.s32 1, %s2
  %s5 = scalar_select 0, %s4, %s2
  $region1: #{tpu_custom_call.1} parent=0
    #allocation2 [shape = 'u8[8192]{0}', space=vmem, size = 0x2000, scoped, tag = 'input window, operand 0, single buffered']
    #allocation3 [shape = 's32[1]{0}', space=sflag, size = 0x4, scoped, tag = 'scoped memory for tpu_custom_call.1']
    #allocation4 [shape = 's32[1]{0}', space=sflag, size = 0x4, scoped, tag = 'scoped memory for tpu_custom_call.1']
    #allocation5 [shape = 'u8[8192]{0}', space=vmem, size = 0x2000, scoped, tag = 'output window, operand 0, single buffered']
    %6 = vsyncpa [#allocation3], 0
    %7 = vsyncpa [#allocation4], 0
    // Predicated region
    $region2: #{tpu_custom_call.1} parent=1 // pred_check
      _
    $region3: #{tpu_custom_call.1} parent=1 // pred_check_branch
      %9 = sbr.rel (0) target = $region5
    $region4: #{tpu_custom_call.1} parent=1 // pred_region
      %s11 = ssub.s32 256, 256
      %12 = vsyncadd [#allocation3], %s11
      %s14 = sshll.u32 [#allocation2], 4
      %s15 = int_to_ptr.vmem [resolvable:$true] %s14
      %17 = dma.hbm_to_vmem [thread:$0]  %s0, 256, %s15, [#allocation3]
    $region5: #{tpu_custom_call.1} parent=1 // pred_fallthru
      _
    // Predicated region
    $region6: #{tpu_custom_call.1} parent=1 // pred_check
      _
    $region7: #{tpu_custom_call.1} parent=1 // pred_check_branch
      %19 = sbr.rel (0) target = $region9
    $region8: #{tpu_custom_call.1} parent=1 // pred_region
      %20 = dma.done [#allocation3], 256
    $region9: #{tpu_custom_call.1} parent=1 // pred_fallthru
      _
    %v21 = vld [vmem:[#allocation2] sm:$0xff]
    %v22 = vld [vmem:[#allocation2 + $0x8] sm:$0xff]
    %23 = vst [vmem:[#allocation5] sm:$0xff] %v21
    %24 = vst [vmem:[#allocation5 + $0x8] sm:$0xff] %v22
    // Predicated region
    $region10: #{tpu_custom_call.1} parent=1 // pred_check
      _
    $region11: #{tpu_custom_call.1} parent=1 // pred_check_branch
      %26 = sbr.rel (0) target = $region13
    $region12: #{tpu_custom_call.1} parent=1 // pred_region
      %s28 = ssub.s32 256, 256
      %29 = vsyncadd [#allocation4], %s28
      %s31 = sshll.u32 [#allocation5], 4
      %s32 = int_to_ptr.vmem [resolvable:$true] %s31
      %34 = dma.vmem_to_hbm [thread:$0]  %s32, 256, %s1, [#allocation4]
    $region13: #{tpu_custom_call.1} parent=1 // pred_fallthru
      _
    // Predicated region
    $region14: #{tpu_custom_call.1} parent=1 // pred_check
      _
    $region15: #{tpu_custom_call.1} parent=1 // pred_check_branch
      %36 = sbr.rel (0) target = $region17
    $region16: #{tpu_custom_call.1} parent=1 // pred_region
      %37 = dma.done [#allocation4], 256
    $region17: #{tpu_custom_call.1} parent=1 // pred_fallthru
      _
    %38 = vsyncpa [#allocation3], 1
    %39 = vsyncpa [#allocation4], 1

</llo_original>
